<compile_context>
chip_gen: v6e
topology: v6e:2x2x1
jax: 0.10.0
libtpu: 0.0.40
codegen_flags: <defaults>
</compile_context>

<pallas_src>
import jax
import jax.numpy as jnp
from jax import lax
from jax.experimental import pallas as pl
from jax.experimental.pallas import tpu as pltpu

LANES = 128
CHUNK_ROWS = 128                    # rows per fori_loop iteration (16 f32 vregs/operand)
BLOCK_BYTES = 4 * 1024 * 1024       # per-input streaming block target (byte-based)


def _num_cores_and_core_semantics():
    """2 TensorCores only on v7x; everything else streams on a single TC."""
    try:
        kind = jax.devices()[0].device_kind.lower()
    except Exception:
        kind = ""
    if "v7" in kind or "7x" in kind:
        # Plain "parallel" barely changes codegen; CORE_PARALLEL actually shards.
        return 2, getattr(pltpu, "CORE_PARALLEL", "parallel")
    return 1, "arbitrary"


def _make_mae_kernel(rows: int, tile_m: int, chunk: int, inner: int):
    """Sum |real - fake| into an (8, LANES) per-core accumulator (the output block)."""
    n_chunks = tile_m // chunk

    def kernel(f_ref, r_ref, o_ref):
        c = pl.program_id(0)   # core axis (size 1 on v5e/v6e, 2 on v7x)
        i = pl.program_id(1)   # streaming / reduction axis

        @pl.when(i == 0)
        def _init():
            o_ref[...] = jnp.zeros_like(o_ref)

        # Logical (unclamped) global row offset of this block.
        start = (c * inner + i) * tile_m

        def chunk_absdiff(k):
            r0 = pl.multiple_of(k * chunk, 8)
            a = f_ref[pl.ds(r0, chunk), :].astype(jnp.float32)
            b = r_ref[pl.ds(r0, chunk), :].astype(jnp.float32)
            return jnp.abs(b - a), r0

        def reduce_to_vreg(d):
            # (chunk, 128) -> (8, 128): leading-dim-only reshape + VPU adds.
            return d.reshape(chunk // 8, 8, LANES).sum(axis=0)

        # Fast path: block fully in bounds -> no iota/compare/select at all.
        @pl.when(start + tile_m <= rows)
        def _fast():
            def body(k, acc):
                d, _ = chunk_absdiff(k)
                return acc + reduce_to_vreg(d)
            o_ref[...] += lax.fori_loop(
                0, n_chunks, body, jnp.zeros((8, LANES), jnp.float32))

        # Boundary path: partial last block, or fully-clamped duplicate block
        # on the second core (contributes exactly zero). Garbage rows read past
        # the logical end of the array are masked here.
        @pl.when(start + tile_m > rows)
        def _masked():
            def body(k, acc):
                d, r0 = chunk_absdiff(k)
                row_ids = (start + r0) + lax.broadcasted_iota(
                    jnp.int32, (chunk, LANES), 0)
                d = jnp.where(row_ids < rows, d, 0.0)
                return acc + reduce_to_vreg(d)
            o_ref[...] += lax.fori_loop(
                0, n_chunks, body, jnp.zeros((8, LANES), jnp.float32))

    return kernel


def grad_loss(grad_fake: jax.Array, grad_real: jax.Array) -> jax.Array:
    """Scalar mean(|grad_real - grad_fake|), hot path in a Pallas TPU kernel."""
    assert grad_fake.shape == grad_real.shape
    n_total = grad_fake.size

    f = grad_fake.reshape(-1)
    r = grad_real.reshape(-1)

    # Ragged lane tail (< 128 elements): plain JAX; slicing it copies < 1 KiB.
    lane_tail = n_total % LANES
    main_n = n_total - lane_tail
    tail_sum = jnp.float32(0.0)
    if lane_tail:
        tail_sum = jnp.sum(
            jnp.abs(r[main_n:].astype(jnp.float32) - f[main_n:].astype(jnp.float32)))

    rows = main_n // LANES
    itemsize = jnp.dtype(grad_fake.dtype).itemsize
    sub = {4: 8, 2: 16, 1: 32}.get(itemsize, 8)   # sublane packing per dtype

    if rows < sub:
        # Tiny input: not worth a kernel launch.
        main_sum = jnp.float32(0.0)
        if rows:
            main_sum = jnp.sum(
                jnp.abs(r[:main_n].astype(jnp.float32) - f[:main_n].astype(jnp.float32)))
        return (main_sum + tail_sum) / jnp.float32(n_total)

    # Lane-dense 2D view of the main part.  When n % 128 == 0 the reshape is
    # free; otherwise allow the slice+reshape to fuse into the kernel operands
    # so XLA doesn't materialize a near-full HBM copy of both inputs.
    allow_fusion = None
    if lane_tail:
        f2 = f[:main_n].reshape(rows, LANES)
        r2 = r[:main_n].reshape(rows, LANES)
        allow_fusion = [True, True]
    else:
        f2 = f.reshape(rows, LANES)
        r2 = r.reshape(rows, LANES)

    # Byte-based tile: target BLOCK_BYTES per input block, rows a multiple of
    # the inner chunk (and therefore of the dtype's sublane packing).
    budget_rows = max(sub, BLOCK_BYTES // (LANES * itemsize))
    if rows >= CHUNK_ROWS:
        tile_m = min(budget_rows, (rows // CHUNK_ROWS) * CHUNK_ROWS)
        tile_m = max(CHUNK_ROWS, (tile_m // CHUNK_ROWS) * CHUNK_ROWS)
        chunk = CHUNK_ROWS
    else:
        tile_m = (rows // sub) * sub          # whole small input in one block
        chunk = tile_m

    num_cores, core_sem = _num_cores_and_core_semantics()

    total_blocks = pl.cdiv(rows, tile_m)
    inner = pl.cdiv(total_blocks, num_cores)
    grid = (num_cores, inner)

    if num_cores == 1:
        def in_map(c, i):                      # no clamp needed on 1-TC chips
            return (i, 0)
    else:
        def in_map(c, i):
            # Clamp so every DMA stays in-bounds; out-of-range logical blocks
            # are fully masked inside the kernel (contribute zero).
            return (jnp.minimum(c * inner + i, total_blocks - 1), 0)

    # Raise the scoped-VMEM limit only when the pipelined footprint needs it
    # (2 inputs x 2 pipeline buffers x block) — i.e. large tiles on v5e.
    footprint = 4 * tile_m * LANES * itemsize + num_cores * 8 * LANES * 4
    vmem_limit = 32 * 1024 * 1024 if footprint > 12 * 1024 * 1024 else None

    partials = pl.pallas_call(
        _make_mae_kernel(rows, tile_m, chunk, inner),
        out_shape=jax.ShapeDtypeStruct((num_cores * 8, LANES), jnp.float32),
        grid_spec=pltpu.PrefetchScalarGridSpec(
            num_scalar_prefetch=0,
            grid=grid,
            in_specs=[
                pl.BlockSpec((tile_m, LANES), in_map),
                pl.BlockSpec((tile_m, LANES), in_map),
            ],
            out_specs=pl.BlockSpec((8, LANES), lambda c, i: (c, 0)),
        ),
        compiler_params=pltpu.CompilerParams(
            dimension_semantics=(core_sem, "arbitrary"),
            vmem_limit_bytes=vmem_limit,
            allow_input_fusion=allow_fusion,
        ),
    )(f2, r2)

    # Final (tiny) cross-lane/sublane reduce + mean in plain JAX.
    return (jnp.sum(partials) + tail_sum) / jnp.float32(n_total)


if __name__ == "__main__":
    key = jax.random.PRNGKey(0)
    k1, k2 = jax.random.split(key)
    # Small NCHW-shaped "gradient" tensors, consistent with an image-gradient loss.
    grad_fake = jax.random.normal(k1, (2, 4, 16, 16), dtype=jnp.float32)
    grad_real = jax.random.normal(k2, (2, 4, 16, 16), dtype=jnp.float32)

    loss = jax.jit(grad_loss)(grad_fake, grad_real)
    jax.block_until_ready(loss)

    # Cross-check against plain-JAX reference of the PyTorch semantics.
    ref = jnp.sum(jnp.mean(jnp.abs(grad_real - grad_fake)))
    assert jnp.allclose(loss, ref, rtol=1e-5, atol=1e-6), (loss, ref)

    print("KERNEL_OK")
</pallas_src>

<mosaic_0001>
module attributes {stable_mosaic.version = 11 : i64} {
  func.func @kernel(%arg0: i32, %arg1: i32, %arg2: memref<16x128xf32, #tpu.memory_space<vmem>>, %arg3: memref<16x128xf32, #tpu.memory_space<vmem>>, %arg4: memref<8x128xf32, #tpu.memory_space<vmem>>) attributes {dimension_semantics = [#tpu.dimension_semantics<arbitrary>, #tpu.dimension_semantics<arbitrary>], iteration_bounds = array<i64: 1, 1>, scalar_prefetch = 0 : i64, scratch_operands = 0 : i64, tpu.core_type = #tpu.core_type<tc>, window_params = [{transform_indices = @transform_0, window_bounds = array<i64: 16, 128>}, {transform_indices = @transform_1, window_bounds = array<i64: 16, 128>}, {transform_indices = @transform_2, window_bounds = array<i64: 8, 128>}]} {
    %c0_i32 = arith.constant 0 : i32
    %0 = arith.cmpi eq, %arg1, %c0_i32 : i32
    %1 = arith.extui %0 : i1 to i32
    %c0_i32_0 = arith.constant 0 : i32
    %2 = arith.cmpi ne, %1, %c0_i32_0 : i32
    scf.if %2 {
      %cst = arith.constant 0.000000e+00 : f32
      %14 = vector.broadcast %cst : f32 to vector<8x128xf32>
      %c0 = arith.constant 0 : index
      %c0_7 = arith.constant 0 : index
      %15 = vector.load %arg4[%c0, %c0_7] : memref<8x128xf32, #tpu.memory_space<vmem>>, vector<8x128xf32>
      tpu.vector_store %arg4[%c0, %c0_7], %14 {strides = array<i32>} : memref<8x128xf32, #tpu.memory_space<vmem>>, vector<8x128xf32>,
    } else {
    }
    %c1_i32 = arith.constant 1 : i32
    %3 = arith.muli %arg0, %c1_i32 : i32
    %4 = arith.addi %3, %arg1 : i32
    %c16_i32 = arith.constant 16 : i32
    %5 = arith.muli %4, %c16_i32 : i32
    %c16_i32_1 = arith.constant 16 : i32
    %6 = arith.addi %5, %c16_i32_1 : i32
    %c16_i32_2 = arith.constant 16 : i32
    %7 = arith.cmpi sle, %6, %c16_i32_2 : i32
    %8 = arith.extui %7 : i1 to i32
    %c0_i32_3 = arith.constant 0 : i32
    %9 = arith.cmpi ne, %8, %c0_i32_3 : i32
    scf.if %9 {
      %c0 = arith.constant 0 : index
      %c0_7 = arith.constant 0 : index
      %14 = vector.load %arg4[%c0, %c0_7] : memref<8x128xf32, #tpu.memory_space<vmem>>, vector<8x128xf32>
      %cst = arith.constant 0.000000e+00 : f32
      %15 = vector.broadcast %cst : f32 to vector<8x128xf32>
      %c0_i32_8 = arith.constant 0 : i32
      %c16_i32_9 = arith.constant 16 : i32
      %16 = arith.muli %c0_i32_8, %c16_i32_9 : i32
      %17 = tpu.assume_multiple %16, 8 : i32
      %18 = arith.index_cast %17 : i32 to index
      %c0_10 = arith.constant 0 : index
      %19 = vector.load %arg2[%18, %c0_10] : memref<16x128xf32, #tpu.memory_space<vmem>>, vector<16x128xf32>
      %20 = arith.index_cast %17 : i32 to index
      %c0_11 = arith.constant 0 : index
      %21 = vector.load %arg3[%20, %c0_11] : memref<16x128xf32, #tpu.memory_space<vmem>>, vector<16x128xf32>
      %22 = arith.subf %21, %19 : vector<16x128xf32>
      %23 = math.absf %22 : vector<16x128xf32>
      %24 = vector.shape_cast %23 : vector<16x128xf32> to vector<2x8x128xf32>
      %cst_12 = arith.constant dense<0.000000e+00> : vector<8x128xf32>
      %25 = vector.multi_reduction <add>, %24, %cst_12 [0] : vector<2x8x128xf32> to vector<8x128xf32>
      %26 = arith.addf %15, %25 : vector<8x128xf32>
      %c1_i32_13 = arith.constant 1 : i32
      %27 = arith.addf %14, %26 : vector<8x128xf32>
      %c0_14 = arith.constant 0 : index
      %c0_15 = arith.constant 0 : index
      %28 = vector.load %arg4[%c0_14, %c0_15] : memref<8x128xf32, #tpu.memory_space<vmem>>, vector<8x128xf32>
      tpu.vector_store %arg4[%c0_14, %c0_15], %27 {strides = array<i32>} : memref<8x128xf32, #tpu.memory_space<vmem>>, vector<8x128xf32>,
    } else {
    }
    %c16_i32_4 = arith.constant 16 : i32
    %10 = arith.addi %5, %c16_i32_4 : i32
    %c16_i32_5 = arith.constant 16 : i32
    %11 = arith.cmpi sgt, %10, %c16_i32_5 : i32
    %12 = arith.extui %11 : i1 to i32
    %c0_i32_6 = arith.constant 0 : i32
    %13 = arith.cmpi ne, %12, %c0_i32_6 : i32
    scf.if %13 {
      %c0 = arith.constant 0 : index
      %c0_7 = arith.constant 0 : index
      %14 = vector.load %arg4[%c0, %c0_7] : memref<8x128xf32, #tpu.memory_space<vmem>>, vector<8x128xf32>
      %cst = arith.constant 0.000000e+00 : f32
      %15 = vector.broadcast %cst : f32 to vector<8x128xf32>
      %c0_i32_8 = arith.constant 0 : i32
      %c16_i32_9 = arith.constant 16 : i32
      %16 = arith.muli %c0_i32_8, %c16_i32_9 : i32
      %17 = tpu.assume_multiple %16, 8 : i32
      %18 = arith.index_cast %17 : i32 to index
      %c0_10 = arith.constant 0 : index
      %19 = vector.load %arg2[%18, %c0_10] : memref<16x128xf32, #tpu.memory_space<vmem>>, vector<16x128xf32>
      %20 = arith.index_cast %17 : i32 to index
      %c0_11 = arith.constant 0 : index
      %21 = vector.load %arg3[%20, %c0_11] : memref<16x128xf32, #tpu.memory_space<vmem>>, vector<16x128xf32>
      %22 = arith.subf %21, %19 : vector<16x128xf32>
      %23 = math.absf %22 : vector<16x128xf32>
      %24 = arith.addi %5, %17 : i32
      %25 = tpu.iota {dimensions = array<i32: 0>} : vector<16x128xi32>
      %26 = vector.broadcast %24 : i32 to vector<16x128xi32>
      %27 = arith.addi %26, %25 : vector<16x128xi32>
      %c16_i32_12 = arith.constant 16 : i32
      %28 = vector.broadcast %c16_i32_12 : i32 to vector<16x128xi32>
      %29 = arith.cmpi slt, %27, %28 : vector<16x128xi32>
      %cst_13 = arith.constant 0.000000e+00 : f32
      %30 = vector.broadcast %cst_13 : f32 to vector<16x128xf32>
      %31 = arith.select %29, %23, %30 : vector<16x128xi1>, vector<16x128xf32>
      %32 = vector.shape_cast %31 : vector<16x128xf32> to vector<2x8x128xf32>
      %cst_14 = arith.constant dense<0.000000e+00> : vector<8x128xf32>
      %33 = vector.multi_reduction <add>, %32, %cst_14 [0] : vector<2x8x128xf32> to vector<8x128xf32>
      %34 = arith.addf %15, %33 : vector<8x128xf32>
      %c1_i32_15 = arith.constant 1 : i32
      %35 = arith.addf %14, %34 : vector<8x128xf32>
      %c0_16 = arith.constant 0 : index
      %c0_17 = arith.constant 0 : index
      %36 = vector.load %arg4[%c0_16, %c0_17] : memref<8x128xf32, #tpu.memory_space<vmem>>, vector<8x128xf32>
      tpu.vector_store %arg4[%c0_16, %c0_17], %35 {strides = array<i32>} : memref<8x128xf32, #tpu.memory_space<vmem>>, vector<8x128xf32>,
    } else {
    }
    return
  }
  func.func @transform_0(%arg0: i32, %arg1: i32) -> (i32, i32) {
    %c0_i32 = arith.constant 0 : i32
    %c0_i32_0 = arith.constant 0 : i32
    return %arg1, %c0_i32 : i32, i32
  }
  func.func @transform_1(%arg0: i32, %arg1: i32) -> (i32, i32) {
    %c0_i32 = arith.constant 0 : i32
    %c0_i32_0 = arith.constant 0 : i32
    return %arg1, %c0_i32 : i32, i32
  }
  func.func @transform_2(%arg0: i32, %arg1: i32) -> (i32, i32) {
    %c0_i32 = arith.constant 0 : i32
    %c0_i32_0 = arith.constant 0 : i32
    return %arg0, %c0_i32 : i32, i32
  }
}

</mosaic_0001>

<llo_original>
// kernel: grad_loss.1
$region0: #{grad_loss.1}
  #allocation0 [shape = 'u32[]', space=smem, size = 0x4, offset = 0x4, fixed_abs, tag = 'smem constant byte address 0x4 - core index']
  #allocation1 [shape = 'u32[144,128]{1,0:T(1,128)}', space=vmem, size = 0x12000, scoped, tag = 'internal scratch']
  %s0 = inlined_call_operand.vmem [shape: f32[16,128], index: 0, kind: input, shape index: {}]
  %s1 = inlined_call_operand.vmem [shape: f32[16,128], index: 1, kind: input, shape index: {}]
  %s2 = inlined_call_operand.vmem [shape: f32[8,128], index: 2, kind: output, shape index: {}]
  %s3 = sld [smem:[#allocation0]]
  $region30: #{grad_loss.1} parent=0
    _
  %s5 = ssub.s32 1, %s3
  %s6 = scalar_select 0, %s5, %s3
  // Predicated region
  $region2: #{grad_loss.1} parent=0 // pred_check
    _
  $region3: #{grad_loss.1} parent=0 // pred_check_branch
    %8 = sbr.rel (0) target = $region5
  $region4: #{grad_loss.1} parent=0 // pred_region
    _
  $region5: #{grad_loss.1} parent=0 // pred_fallthru
    _
  // Predicated region
  $region6: #{grad_loss.1} parent=0 // pred_check
    _
  $region7: #{grad_loss.1} parent=0 // pred_check_branch
    %10 = sbr.rel (0) target = $region9
  $region8: #{grad_loss.1} parent=0 // pred_region
    _
  $region9: #{grad_loss.1} parent=0 // pred_fallthru
    _
  %p11 = scmp.eq.s32.totalorder 0, 0
  // Predicated region
  $region10: #{grad_loss.1} parent=0 // pred_check
    %p12 = pneg %p11
  $region11: #{grad_loss.1} parent=0 // pred_check_branch
    %14 = sbr.rel (%p12) target = $region13
  $region12: #{grad_loss.1} parent=0 // pred_region
    %15 = vst [vmem:[%s2] sm:$0xff] 0.0
  $region13: #{grad_loss.1} parent=0 // pred_fallthru
    _
  %s16 = sadd.s32 0, 0
  %s17 = smul.u32 %s16, 16
  %s18 = sadd.s32 %s17, 16
  %p19 = scmp.le.s32.totalorder %s18, 16
  // Predicated region
  $region14: #{grad_loss.1} parent=0 // pred_check
    %p20 = pneg %p19
  $region15: #{grad_loss.1} parent=0 // pred_check_branch
    %22 = sbr.rel (%p20) target = $region17
  $region16: #{grad_loss.1} parent=0 // pred_region
    %v23 = vld [vmem:[%s2] sm:$0xff]
    %v24 = vld [vmem:[%s0] sm:$0xff]
    %v25 = vld [vmem:[%s0 + $0x8] sm:$0xff]
    %v26 = vld [vmem:[%s1] sm:$0xff]
    %v27 = vld [vmem:[%s1 + $0x8] sm:$0xff]
    %v28 = vsub.f32 %v26, %v24
    %v29 = vsub.f32 %v27, %v25
    %v30 = vand.u32 2147483647, %v28
    %v31 = vand.u32 2147483647, %v29
    %v32 = vadd.f32 %v30, %v31
    %v33 = vadd.f32 %v32, 0.0
    %v34 = vadd.f32 %v23, %v33
    %35 = vst [vmem:[%s2] sm:$0xff] %v34
  $region17: #{grad_loss.1} parent=0 // pred_fallthru
    _
  %p36 = scmp.gt.s32.totalorder %s18, 16
  // Predicated region
  $region18: #{grad_loss.1} parent=0 // pred_check
    %p37 = pneg %p36
  $region19: #{grad_loss.1} parent=0 // pred_check_branch
    %39 = sbr.rel (%p37) target = $region21
  $region20: #{grad_loss.1} parent=0 // pred_region
    %v40 = vld [vmem:[%s2] sm:$0xff]
    %v41 = vld [vmem:[%s0] sm:$0xff]
    %v42 = vld [vmem:[%s0 + $0x8] sm:$0xff]
    %v43 = vld [vmem:[%s1] sm:$0xff]
    %v44 = vld [vmem:[%s1 + $0x8] sm:$0xff]
    %v45 = vsub.f32 %v43, %v41
    %v46 = vsub.f32 %v44, %v42
    %v47 = vand.u32 2147483647, %v45
    %v48 = vand.u32 2147483647, %v46
    %s49 = sadd.s32 %s17, 0
    %v50 = vlaneseq
    %v51 = vshrl.u32 %v50, 7
    %v52 = vadd.s32 %v51, 8
    %v53 = vstv %s49
    %v54 = vadd.s32 %v53, %v51
    %v55 = vadd.s32 %v53, %v52
    %vm56 = vcmp.lt.s32.totalorder %v54, 16
    %vm57 = vcmp.lt.s32.totalorder %v55, 16
    %v58 = vsel %vm56, %v47, 0.0
    %v59 = vsel %vm57, %v48, 0.0
    %v60 = vadd.f32 %v58, %v59
    %v61 = vadd.f32 %v60, 0.0
    %v62 = vadd.f32 %v40, %v61
    %63 = vst [vmem:[%s2] sm:$0xff] %v62
  $region21: #{grad_loss.1} parent=0 // pred_fallthru
    _
  // Predicated region
  $region22: #{grad_loss.1} parent=0 // pred_check
    _
  $region23: #{grad_loss.1} parent=0 // pred_check_branch
    %65 = sbr.rel (0) target = $region25
  $region24: #{grad_loss.1} parent=0 // pred_region
    _
  $region25: #{grad_loss.1} parent=0 // pred_fallthru
    _
  // Predicated region
  $region26: #{grad_loss.1} parent=0 // pred_check
    _
  $region27: #{grad_loss.1} parent=0 // pred_check_branch
    %67 = sbr.rel (0) target = $region29
  $region28: #{grad_loss.1} parent=0 // pred_region
    _
  $region29: #{grad_loss.1} parent=0 // pred_fallthru
    _

</llo_original>
